<compile_context>
chip_gen: v7x
topology: tpu7x:2x2x1
jax: 0.10.0
libtpu: 0.0.40
codegen_flags: <defaults>
</compile_context>

<pallas_src>
import functools

import jax
import jax.numpy as jnp
from jax import lax
from jax.experimental import pallas as pl
from jax.experimental.pallas import tpu as pltpu


def _round_up(a: int, m: int) -> int:
    return ((a + m - 1) // m) * m


def _pick_tile(dim_padded: int, base: int, cap: int) -> int:
    """Largest multiple of `base` that divides `dim_padded` and is <= cap."""
    cap = max(base, min(cap, dim_padded))
    best = base
    t = base
    while t <= cap:
        if dim_padded % t == 0:
            best = t
        t += base
    return best


def _linear_kernel(x_ref, w_ref, b_ref, o_ref):
    # x_ref: (tm, tk)   w_ref: (tn, tk)  (PyTorch (OUT, IN) layout)
    # b_ref: (1, tn)    o_ref: (tm, tn)  f32, VMEM-resident across the K sweep
    k = pl.program_id(2)

    @pl.when(k == 0)
    def _():
        # Seed the accumulator with the bias -> no epilogue add needed.
        o_ref[...] = jnp.broadcast_to(b_ref[...], o_ref.shape).astype(o_ref.dtype)

    # Contract x dim 1 with w dim 1 -> (tm, tn); transposed RHS is handled by
    # the MXU natively (no data movement / wrapper transpose).
    o_ref[...] += lax.dot_general(
        x_ref[...], w_ref[...],
        dimension_numbers=(((1,), (1,)), ((), ())),
        preferred_element_type=jnp.float32)


@functools.partial(jax.jit, static_argnames=("tm", "tn", "tk"))
def linear_forward(x, weight, bias, *, tm=None, tn=None, tk=None):
    """Equivalent of torch.nn.Linear(inputSize, outputSize)(x).

    x:      (B, inputSize)
    weight: (outputSize, inputSize)   (PyTorch convention, NOT transposed)
    bias:   (outputSize,)
    returns (B, outputSize) float32
    """
    B, K = x.shape
    N, Kw = weight.shape
    assert K == Kw, (K, Kw)
    assert bias.shape == (N,)

    # Pad only to the hardware (8, 128) granularity (often a no-op).
    Mp, Kp, Np = _round_up(B, 8), _round_up(K, 128), _round_up(N, 128)

    # Tile sizes: divisors of the padded dims, capped for VMEM.  Worst case
    # (256, 512, 2048) f32 double-buffered is ~13 MiB.
    tm = tm or _pick_tile(Mp, 8, 256)
    tn = tn or _pick_tile(Np, 128, 512)
    tk = tk or _pick_tile(Kp, 128, 2048)

    # v7x megacore: if M is a single block, make sure N has >= 2 blocks (when
    # it can be split) so both TensorCores get work on the parallel axes.
    if Mp // tm == 1 and Np // tn == 1 and Np >= 256:
        tn = _pick_tile(Np, 128, Np // 2)

    # Zero padding: padded K columns contribute 0 to the dot; padded M rows /
    # N columns are sliced off below.  No copy when already aligned.
    x_p = x if (Mp == B and Kp == K) else jnp.pad(x, ((0, Mp - B), (0, Kp - K)))
    w_p = weight if (Np == N and Kp == K) else jnp.pad(
        weight, ((0, Np - N), (0, Kp - K)))
    b_p = bias if Np == N else jnp.pad(bias, (0, Np - N))
    b_p = b_p.reshape(1, Np)

    grid = (Mp // tm, Np // tn, Kp // tk)

    out_padded = pl.pallas_call(
        _linear_kernel,
        out_shape=jax.ShapeDtypeStruct((Mp, Np), jnp.float32),
        grid_spec=pltpu.PrefetchScalarGridSpec(
            num_scalar_prefetch=0,
            grid=grid,
            in_specs=[
                pl.BlockSpec((tm, tk), lambda i, j, k: (i, k)),   # x tile
                pl.BlockSpec((tn, tk), lambda i, j, k: (j, k)),   # w tile (OUT, IN)
                pl.BlockSpec((1, tn), lambda i, j, k: (0, j)),    # bias tile
            ],
            out_specs=pl.BlockSpec((tm, tn), lambda i, j, k: (i, j)),
        ),
        compiler_params=pltpu.CompilerParams(
            dimension_semantics=("parallel", "parallel", "arbitrary"),
            vmem_limit_bytes=32 * 1024 * 1024),
    )(x_p, w_p, b_p)

    if Mp == B and Np == N:
        return out_padded
    return out_padded[:B, :N]


if __name__ == "__main__":
    key = jax.random.PRNGKey(0)

    # --- Case 1: LinearRegression(inputSize=32, outputSize=16), batch=8 -----
    batch, input_size, output_size = 8, 32, 16
    kx, kw, kb, key = jax.random.split(key, 4)

    bound = 1.0 / (input_size ** 0.5)
    x = jax.random.normal(kx, (batch, input_size), dtype=jnp.float32)
    weight = jax.random.uniform(kw, (output_size, input_size),
                                minval=-bound, maxval=bound, dtype=jnp.float32)
    bias = jax.random.uniform(kb, (output_size,),
                              minval=-bound, maxval=bound, dtype=jnp.float32)

    out = jax.block_until_ready(linear_forward(x, weight, bias))
    ref = x @ weight.T + bias
    assert out.shape == (batch, output_size)
    assert jnp.allclose(out, ref, atol=1e-5, rtol=1e-5)

    # --- Case 2: K=640 now runs un-padded (tk=640, one K step), N split for
    #             megacore (grid (1, 2, 1)) -------------------------------
    b2_, in2, out2 = 64, 640, 256
    k1, k2, k3 = jax.random.split(key, 3)
    bound2 = 1.0 / (in2 ** 0.5)
    x2 = jax.random.normal(k1, (b2_, in2), dtype=jnp.float32)
    w2 = jax.random.uniform(k2, (out2, in2), minval=-bound2, maxval=bound2,
                            dtype=jnp.float32)
    b2 = jax.random.uniform(k3, (out2,), minval=-bound2, maxval=bound2,
                            dtype=jnp.float32)

    y2 = jax.block_until_ready(linear_forward(x2, w2, b2))
    ref2 = x2 @ w2.T + b2
    assert y2.shape == (b2_, out2)
    assert jnp.allclose(y2, ref2, atol=1e-4, rtol=1e-4)

    # --- Case 3: multi-step K accumulation (K padded 2560 -> tk<=2048 => 2
    #             divisor-aligned K steps of 1280) ------------------------
    b3_, in3, out3 = 16, 2560, 384
    k4, k5, k6 = jax.random.split(k3, 3)
    bound3 = 1.0 / (in3 ** 0.5)
    x3 = jax.random.normal(k4, (b3_, in3), dtype=jnp.float32)
    w3 = jax.random.uniform(k5, (out3, in3), minval=-bound3, maxval=bound3,
                            dtype=jnp.float32)
    b3 = jax.random.uniform(k6, (out3,), minval=-bound3, maxval=bound3,
                            dtype=jnp.float32)

    y3 = jax.block_until_ready(linear_forward(x3, w3, b3))
    ref3 = x3 @ w3.T + b3
    assert y3.shape == (b3_, out3)
    assert jnp.allclose(y3, ref3, atol=1e-4, rtol=1e-4)

    print("KERNEL_OK")
</pallas_src>

<mosaic_0001>
module attributes {stable_mosaic.version = 11 : i64} {
  func.func @_linear_kernel(%arg0: i32, %arg1: i32, %arg2: i32, %arg3: memref<8x128xf32, #tpu.memory_space<vmem>>, %arg4: memref<128x128xf32, #tpu.memory_space<vmem>>, %arg5: memref<1x128xf32, #tpu.memory_space<vmem>>, %arg6: memref<8x128xf32, #tpu.memory_space<vmem>>) attributes {dimension_semantics = [#tpu.dimension_semantics<parallel>, #tpu.dimension_semantics<parallel>, #tpu.dimension_semantics<arbitrary>], iteration_bounds = array<i64: 1, 1, 1>, scalar_prefetch = 0 : i64, scratch_operands = 0 : i64, tpu.core_type = #tpu.core_type<tc>, window_params = [{transform_indices = @transform_0, window_bounds = array<i64: 8, 128>}, {transform_indices = @transform_1, window_bounds = array<i64: 128, 128>}, {transform_indices = @transform_2, window_bounds = array<i64: 1, 128>}, {transform_indices = @transform_3, window_bounds = array<i64: 8, 128>}]} {
    %c0_i32 = arith.constant 0 : i32
    %0 = arith.cmpi eq, %arg2, %c0_i32 : i32
    %1 = arith.extui %0 : i1 to i32
    %c0_i32_0 = arith.constant 0 : i32
    %2 = arith.cmpi ne, %1, %c0_i32_0 : i32
    scf.if %2 {
      %c0_8 = arith.constant 0 : index
      %c0_9 = arith.constant 0 : index
      %9 = vector.load %arg5[%c0_8, %c0_9] : memref<1x128xf32, #tpu.memory_space<vmem>>, vector<1x128xf32>
      %10 = vector.shape_cast %9 : vector<1x128xf32> to vector<1x128xf32>
      %11 = vector.broadcast %10 : vector<1x128xf32> to vector<8x128xf32>
      %c0_10 = arith.constant 0 : index
      %c0_11 = arith.constant 0 : index
      %12 = vector.load %arg6[%c0_10, %c0_11] : memref<8x128xf32, #tpu.memory_space<vmem>>, vector<8x128xf32>
      tpu.vector_store %arg6[%c0_10, %c0_11], %11 {strides = array<i32>} : memref<8x128xf32, #tpu.memory_space<vmem>>, vector<8x128xf32>,
    } else {
    }
    %c0 = arith.constant 0 : index
    %c0_1 = arith.constant 0 : index
    %3 = vector.load %arg6[%c0, %c0_1] : memref<8x128xf32, #tpu.memory_space<vmem>>, vector<8x128xf32>
    %c0_2 = arith.constant 0 : index
    %c0_3 = arith.constant 0 : index
    %4 = vector.load %arg3[%c0_2, %c0_3] : memref<8x128xf32, #tpu.memory_space<vmem>>, vector<8x128xf32>
    %c0_4 = arith.constant 0 : index
    %c0_5 = arith.constant 0 : index
    %5 = vector.load %arg4[%c0_4, %c0_5] : memref<128x128xf32, #tpu.memory_space<vmem>>, vector<128x128xf32>
    %cst = arith.constant dense<0.000000e+00> : vector<8x128xf32>
    %6 = tpu.matmul %4, %5, %cst {dimension_numbers = #tpu.dot_dimension_numbers<[1], [1], [0], [0], [0, 0, 1, 0], [], []>} : vector<8x128xf32>, vector<128x128xf32>, vector<8x128xf32> -> vector<8x128xf32>
    %7 = arith.addf %3, %6 : vector<8x128xf32>
    %c0_6 = arith.constant 0 : index
    %c0_7 = arith.constant 0 : index
    %8 = vector.load %arg6[%c0_6, %c0_7] : memref<8x128xf32, #tpu.memory_space<vmem>>, vector<8x128xf32>
    tpu.vector_store %arg6[%c0_6, %c0_7], %7 {strides = array<i32>} : memref<8x128xf32, #tpu.memory_space<vmem>>, vector<8x128xf32>,
    return
  }
  func.func @transform_0(%arg0: i32, %arg1: i32, %arg2: i32) -> (i32, i32) {
    %c0_i32 = arith.constant 0 : i32
    return %arg0, %arg2 : i32, i32
  }
  func.func @transform_1(%arg0: i32, %arg1: i32, %arg2: i32) -> (i32, i32) {
    %c0_i32 = arith.constant 0 : i32
    return %arg1, %arg2 : i32, i32
  }
  func.func @transform_2(%arg0: i32, %arg1: i32, %arg2: i32) -> (i32, i32) {
    %c0_i32 = arith.constant 0 : i32
    %c0_i32_0 = arith.constant 0 : i32
    return %c0_i32, %arg1 : i32, i32
  }
  func.func @transform_3(%arg0: i32, %arg1: i32, %arg2: i32) -> (i32, i32) {
    %c0_i32 = arith.constant 0 : i32
    return %arg0, %arg1 : i32, i32
  }
}

</mosaic_0001>

<llo_original>
// kernel: linear_forward.1
$region0: #{linear_forward.1}
  #allocation0 [shape = 'u32[]', space=smem, size = 0x4, offset = 0x4, fixed_abs, tag = 'smem constant byte address 0x4 - core index']
  #allocation1 [shape = 'u32[144,128]{1,0:T(1,128)}', space=vmem, size = 0x12000, scoped, tag = 'internal scratch']
  %s0 = inlined_call_operand.vmem [shape: f32[8,128], index: 0, kind: input, shape index: {}]
  %s1 = inlined_call_operand.vmem [shape: f32[128,128], index: 1, kind: input, shape index: {}]
  %s2 = inlined_call_operand.vmem [shape: f32[1,128], index: 2, kind: input, shape index: {}]
  %s3 = inlined_call_operand.hbm [shape: f32[8,128], index: 3, kind: output, shape index: {}]
  %s4 = sld [smem:[#allocation0]]
  $region26: #{linear_forward.1} parent=0
    _
  %s6 = ssub.s32 1, %s4
  %s7 = scalar_select 0, %s6, %s4
  $region1: #{linear_forward.1} parent=0
    #allocation2 [shape = 'u8[4096]{0}', space=vmem, size = 0x1000, scoped, tag = 'output window, operand 0, single buffered']
    #allocation3 [shape = 's32[1]{0}', space=sflag, size = 0x4, scoped, tag = 'scoped memory for linear_forward.1']
    %8 = vsyncpa [#allocation3], 0
    // Predicated region
    $region2: #{linear_forward.1} parent=1 // pred_check
      _
    $region3: #{linear_forward.1} parent=1 // pred_check_branch
      %10 = sbr.rel (0) target = $region5
    $region4: #{linear_forward.1} parent=1 // pred_region
      _
    $region5: #{linear_forward.1} parent=1 // pred_fallthru
      _
    // Predicated region
    $region6: #{linear_forward.1} parent=1 // pred_check
      _
    $region7: #{linear_forward.1} parent=1 // pred_check_branch
      %12 = sbr.rel (0) target = $region9
    $region8: #{linear_forward.1} parent=1 // pred_region
      _
    $region9: #{linear_forward.1} parent=1 // pred_fallthru
      _
    // Predicated region
    $region10: #{linear_forward.1} parent=1 // pred_check
      _
    $region11: #{linear_forward.1} parent=1 // pred_check_branch
      %14 = sbr.rel (0) target = $region13
    $region12: #{linear_forward.1} parent=1 // pred_region
      _
    $region13: #{linear_forward.1} parent=1 // pred_fallthru
      _
    %p15 = scmp.eq.s32.totalorder 0, 0
    // Predicated region
    $region14: #{linear_forward.1} parent=1 // pred_check
      %p16 = pneg %p15
    $region15: #{linear_forward.1} parent=1 // pred_check_branch
      %18 = sbr.rel (%p16) target = $region17
    $region16: #{linear_forward.1} parent=1 // pred_region
      %v19 = vld [vmem:[%s2] sm:$0x1]
      %v21 = vlaneseq
      %v22 = vshrl.u32 %v21, 7
      %v23 = vsub.s32 0, %v22
      %v24 = vrot.slane %v19, %v23
      %26 = vst [vmem:[#allocation2] sm:$0xff] %v24
    $region17: #{linear_forward.1} parent=1 // pred_fallthru
      _
    %v27 = vld [vmem:[#allocation2] sm:$0xff]
    %v28 = vld [vmem:[%s0] sm:$0xff]
    %v29 = vld [vmem:[%s1] sm:$0xff]
    %v30 = vld [vmem:[%s1 + $0x8] sm:$0xff]
    %v31 = vld [vmem:[%s1 + $0x10] sm:$0xff]
    %v32 = vld [vmem:[%s1 + $0x18] sm:$0xff]
    %v33 = vld [vmem:[%s1 + $0x20] sm:$0xff]
    %v34 = vld [vmem:[%s1 + $0x28] sm:$0xff]
    %v35 = vld [vmem:[%s1 + $0x30] sm:$0xff]
    %v36 = vld [vmem:[%s1 + $0x38] sm:$0xff]
    %v37 = vld [vmem:[%s1 + $0x40] sm:$0xff]
    %v38 = vld [vmem:[%s1 + $0x48] sm:$0xff]
    %v39 = vld [vmem:[%s1 + $0x50] sm:$0xff]
    %v40 = vld [vmem:[%s1 + $0x58] sm:$0xff]
    %v41 = vld [vmem:[%s1 + $0x60] sm:$0xff]
    %v42 = vld [vmem:[%s1 + $0x68] sm:$0xff]
    %v43 = vld [vmem:[%s1 + $0x70] sm:$0xff]
    %v44 = vld [vmem:[%s1 + $0x78] sm:$0xff]
    %45 = vmatprep.subr.mxu0 0.0
    %46 = vmatpush1.xpose.msra.mxu0 %v29
    %47 = vmatprep.subr.mxu0 0.0
    %48 = vmatpush1.xpose.msra.mxu0 %v30
    %49 = vmatprep.subr.mxu0 0.0
    %50 = vmatpush1.xpose.msra.mxu0 %v31
    %51 = vmatprep.subr.mxu0 0.0
    %52 = vmatpush1.xpose.msra.mxu0 %v32
    %53 = vmatprep.subr.mxu0 0.0
    %54 = vmatpush1.xpose.msra.mxu0 %v33
    %55 = vmatprep.subr.mxu0 0.0
    %56 = vmatpush1.xpose.msra.mxu0 %v34
    %57 = vmatprep.subr.mxu0 0.0
    %58 = vmatpush1.xpose.msra.mxu0 %v35
    %59 = vmatprep.subr.mxu0 0.0
    %60 = vmatpush1.xpose.msra.mxu0 %v36
    %61 = vmatprep.subr.mxu0 0.0
    %62 = vmatpush1.xpose.msra.mxu0 %v37
    %63 = vmatprep.subr.mxu0 0.0
    %64 = vmatpush1.xpose.msra.mxu0 %v38
    %65 = vmatprep.subr.mxu0 0.0
    %66 = vmatpush1.xpose.msra.mxu0 %v39
    %67 = vmatprep.subr.mxu0 0.0
    %68 = vmatpush1.xpose.msra.mxu0 %v40
    %69 = vmatprep.subr.mxu0 0.0
    %70 = vmatpush1.xpose.msra.mxu0 %v41
    %71 = vmatprep.subr.mxu0 0.0
    %72 = vmatpush1.xpose.msra.mxu0 %v42
    %73 = vmatprep.subr.mxu0 0.0
    %74 = vmatpush1.xpose.msra.mxu0 %v43
    %75 = vmatprep.subr.mxu0 0.0
    %76 = vmatpush1.xpose.msra.mxu0 %v44
    %77 = vmatprep.subr.mxu0 0.0
    %78 = vmatpush1.xpose.msra.mxu0 0.0
    %79 = vmatprep.subr.mxu0 0.0
    %80 = vmatpush1.xpose.msra.mxu0 0.0
    %81 = vmatprep.subr.mxu0 0.0
    %82 = vmatpush1.xpose.msra.mxu0 0.0
    %83 = vmatprep.subr.mxu0 0.0
    %84 = vmatpush1.xpose.msra.mxu0 0.0
    %85 = vmatprep.subr.mxu0 0.0
    %86 = vmatpush1.xpose.msra.mxu0 0.0
    %87 = vmatprep.subr.mxu0 0.0
    %88 = vmatpush1.xpose.msra.mxu0 0.0
    %89 = vmatprep.subr.mxu0 0.0
    %90 = vmatpush1.xpose.msra.mxu0 0.0
    %91 = vmatprep.subr.mxu0 0.0
    %92 = vmatpush1.xpose.msra.mxu0 0.0
    %93 = vmatprep.subr.mxu0 0.0
    %94 = vmatpush1.xpose.msra.mxu0 0.0
    %95 = vmatprep.subr.mxu0 0.0
    %96 = vmatpush1.xpose.msra.mxu0 0.0
    %97 = vmatprep.subr.mxu0 0.0
    %98 = vmatpush1.xpose.msra.mxu0 0.0
    %99 = vmatprep.subr.mxu0 0.0
    %100 = vmatpush1.xpose.msra.mxu0 0.0
    %101 = vmatprep.subr.mxu0 0.0
    %102 = vmatpush1.xpose.msra.mxu0 0.0
    %103 = vmatprep.subr.mxu0 0.0
    %104 = vmatpush1.xpose.msra.mxu0 0.0
    %105 = vmatprep.subr.mxu0 0.0
    %106 = vmatpush1.xpose.msra.mxu0 0.0
    %107 = vmatprep.subr.mxu0 0.0
    %108 = vmatpush1.xpose.msra.mxu0 0.0
    %109 = vmatprep.mubr.f32.mxu0 0.0
    %110 = vmatmul.mubr.f32.gmra.mrb[0].mxu0 %v28
    %v111 = vpop.f32.mrb[0].mxu0
    %v112 = vadd.f32 0.0, %v111
    %v113 = vpop.f32.mrb[0].mxu0
    %114 = vdwg.mxu0
    %v115 = vadd.f32 %v27, %v112
    %116 = vst [vmem:[#allocation2] sm:$0xff] %v115
    // Predicated region
    $region18: #{linear_forward.1} parent=1 // pred_check
      _
    $region19: #{linear_forward.1} parent=1 // pred_check_branch
      %118 = sbr.rel (0) target = $region21
    $region20: #{linear_forward.1} parent=1 // pred_region
      %s120 = ssub.s32 128, 128
      %121 = vsyncadd [#allocation3], %s120
      %s123 = sshll.u32 [#allocation2], 4
      %s124 = int_to_ptr.vmem [resolvable:$true] %s123
      %126 = dma.vmem_to_hbm [thread:$0]  %s124, 128, %s3, [#allocation3]
    $region21: #{linear_forward.1} parent=1 // pred_fallthru
      _
    // Predicated region
    $region22: #{linear_forward.1} parent=1 // pred_check
      _
    $region23: #{linear_forward.1} parent=1 // pred_check_branch
      %128 = sbr.rel (0) target = $region25
    $region24: #{linear_forward.1} parent=1 // pred_region
      %129 = dma.done [#allocation3], 128
    $region25: #{linear_forward.1} parent=1 // pred_fallthru
      _
    %130 = vsyncpa [#allocation3], 1

</llo_original>
